<compile_context>
chip_gen: v6e
topology: v6e:2x2x1
jax: 0.10.0
libtpu: 0.0.40
codegen_flags: <defaults>
</compile_context>

<pallas_src>
import os
from concurrent.futures import ThreadPoolExecutor

import numpy as np
import jax
import jax.numpy as jnp
from jax.experimental import pallas as pl
from jax.experimental.pallas import tpu as pltpu

try:  # prefer scipy when present (speed + correctness oracle)
    from scipy.optimize import linear_sum_assignment as _scipy_lsa
except Exception:  # pragma: no cover - scipy optional
    _scipy_lsa = None


# ---------------------------------------------------------------------------
# Pallas kernel: numerically-stable softmax over the class dimension.
# Rows are (B*Q) flattened queries; each grid step handles a sublane-aligned
# tile of rows and the whole (un-padded) class axis, so the reduction is a
# single in-block pass and HBM traffic is exactly one read + one write.
# ---------------------------------------------------------------------------
def _softmax_kernel(x_ref, o_ref):
    x = x_ref[...].astype(jnp.float32)              # (tr, C)
    m = jnp.max(x, axis=-1, keepdims=True)
    e = jnp.exp(x - m)
    s = jnp.sum(e, axis=-1, keepdims=True)
    o_ref[...] = e / s                              # exact normalization (matches reference)


def _round_up(x: int, m: int) -> int:
    return ((x + m - 1) // m) * m


def pallas_softmax(logits: jax.Array, row_tile: int = 512) -> jax.Array:
    """Softmax over dim=2 of a [B, Q, C] tensor, computed on-TPU via Pallas.

    Returns float32 probabilities of shape [B, Q, C].
    """
    B, Q, C = logits.shape
    R = B * Q

    # Row tile: sublane-aligned.  For small/medium inputs pick ~R/2 per block so the
    # grid has >= 2 parallel blocks (both v7x TensorCores get work); for large inputs
    # use the fixed row_tile (512 rows ~ roofline-friendly, still tiny in VMEM).
    if R <= 2 * row_tile:
        tr = max(8, _round_up(pl.cdiv(R, 2), 8))
    else:
        tr = row_tile
    tr = min(tr, _round_up(R, 8))
    grid = pl.cdiv(R, tr)

    x = logits.reshape(R, C)                        # free view; cast happens in-kernel

    out = pl.pallas_call(
        _softmax_kernel,
        out_shape=jax.ShapeDtypeStruct((R, C), jnp.float32),
        grid=(grid,),
        in_specs=[pl.BlockSpec((tr, C), lambda i: (i, 0))],
        out_specs=pl.BlockSpec((tr, C), lambda i: (i, 0)),
        compiler_params=pltpu.CompilerParams(
            dimension_semantics=("parallel",),
        ),
    )(x)
    return out.reshape(B, Q, C)


# ---------------------------------------------------------------------------
# Host-side Hungarian algorithm.
# TODO(synk): the Hungarian / Jonker-Volgenant assignment is an inherently
# sequential combinatorial algorithm with no clean Pallas equivalent; it runs
# on the host over the TPU-computed softmax scores (scipy when available,
# otherwise a numpy-vectorized Kuhn–Munkres fallback).
# ---------------------------------------------------------------------------
def _hungarian_min(cost: np.ndarray):
    """Kuhn–Munkres with dual potentials; cost is (n, m) with n <= m. Minimizes."""
    cost = np.asarray(cost, dtype=np.float64)
    n, m = cost.shape
    INF = np.inf
    u = np.zeros(n + 1)
    v = np.zeros(m + 1)
    p = np.zeros(m + 1, dtype=np.int64)      # p[j] = row matched to column j (1-based)
    way = np.zeros(m + 1, dtype=np.int64)
    for i in range(1, n + 1):
        p[0] = i
        j0 = 0
        minv = np.full(m + 1, INF)
        used = np.zeros(m + 1, dtype=bool)
        while True:
            used[j0] = True
            i0 = p[j0]
            cur = cost[i0 - 1, :] - u[i0] - v[1:]
            upd = (~used[1:]) & (cur < minv[1:])
            minv[1:] = np.where(upd, cur, minv[1:])
            way[1:] = np.where(upd, j0, way[1:])
            masked = np.where(used[1:], INF, minv[1:])
            j1 = int(np.argmin(masked)) + 1
            delta = masked[j1 - 1]
            u[p[used]] += delta
            v[used] -= delta
            minv[~used] -= delta
            j0 = j1
            if p[j0] == 0:
                break
        while True:
            j1 = way[j0]
            p[j0] = p[j1]
            j0 = j1
            if j0 == 0:
                break
    cols = np.zeros(n, dtype=np.int64)
    for j in range(1, m + 1):
        if p[j] != 0:
            cols[p[j] - 1] = j - 1
    rows = np.arange(n, dtype=np.int64)
    return rows, cols


def linear_sum_assignment(cost: np.ndarray, maximize: bool = False):
    if _scipy_lsa is not None:
        return _scipy_lsa(cost, maximize=maximize)
    cost = np.asarray(cost, dtype=np.float64)
    if maximize:
        cost = -cost
    transposed = False
    if cost.shape[0] > cost.shape[1]:
        cost = cost.T
        transposed = True
    rows, cols = _hungarian_min(cost)
    if transposed:
        rows, cols = cols, rows
        order = np.argsort(rows)
        rows, cols = rows[order], cols[order]
    return rows, cols


# ---------------------------------------------------------------------------
# The matcher (forward pass of the PyTorch module).
# ---------------------------------------------------------------------------
class HungarianMatcher:
    def __init__(self, cost_class: float = 1.0, cost_coord: float = 1.0):
        self.cost_class = cost_class
        self.cost_coord = cost_coord
        assert cost_class != 0 or cost_coord != 0

    def __call__(self, outputs):
        pred_logits = outputs["pred_logits"]                       # [B, Q, C]
        pred_coords = outputs["pred_coords"]                       # [B, Q, D]
        B, Q, C = pred_logits.shape

        # softmax over classes (dim=2) — Pallas TPU kernel, float32 output
        probs = pallas_softmax(pred_logits)                        # [B, Q, C]

        # kick off the device->host transfer early so it overlaps host-side setup
        try:
            probs.copy_to_host_async()
        except Exception:
            pass
        probs_np = np.asarray(jax.device_get(probs))               # [B, Q, C]

        # Hungarian assignment on C.T (num_classes x num_queries), maximize scores.
        # probs_np[b].T is a zero-cost numpy view (scipy copies internally anyway).
        def _assign(b):
            _, j = linear_sum_assignment(probs_np[b].T, maximize=True)
            return np.asarray(j[:-1])                              # drop the last match

        if B > 1:
            with ThreadPoolExecutor(max_workers=min(B, os.cpu_count() or 1)) as ex:
                cols = list(ex.map(_assign, range(B)))
        else:
            cols = [_assign(0)]

        idx = jnp.asarray(np.stack(cols, axis=0), dtype=jnp.int32)  # [B, K]
        # one batched gather on device instead of B tiny dispatches
        gathered = jnp.take_along_axis(pred_coords, idx[:, :, None], axis=1)  # [B, K, D]
        return [gathered[b] for b in range(B)]


if __name__ == "__main__":
    key = jax.random.PRNGKey(0)
    k1, k2 = jax.random.split(key)

    B, Q, NUM_CLASSES, D = 2, 8, 6, 4     # batch, num_queries, num_classes, coord dim
    pred_logits = jax.random.normal(k1, (B, Q, NUM_CLASSES), dtype=jnp.float32)
    pred_coords = jax.random.normal(k2, (B, Q, D), dtype=jnp.float32)
    outputs = {"pred_logits": pred_logits, "pred_coords": pred_coords}

    # sanity-check the Pallas softmax against the JAX reference (exact normalization now)
    sm = jax.block_until_ready(pallas_softmax(pred_logits))
    ref = jax.nn.softmax(pred_logits, axis=2)
    np.testing.assert_allclose(np.asarray(sm), np.asarray(ref), rtol=1e-4, atol=1e-5)

    matcher = HungarianMatcher(cost_class=1.0, cost_coord=1.0)
    out = matcher(outputs)

    for p in out:
        jax.block_until_ready(p)
        assert p.shape == (min(NUM_CLASSES, Q) - 1, D)

    print("KERNEL_OK")
</pallas_src>

<mosaic_0001>
module attributes {stable_mosaic.version = 11 : i64} {
  func.func @_softmax_kernel(%arg0: i32, %arg1: memref<8x6xf32, #tpu.memory_space<vmem>>, %arg2: memref<8x6xf32, #tpu.memory_space<vmem>>) attributes {dimension_semantics = [#tpu.dimension_semantics<parallel>], iteration_bounds = array<i64: 2>, scalar_prefetch = 0 : i64, scratch_operands = 0 : i64, tpu.core_type = #tpu.core_type<tc>, window_params = [{transform_indices = @transform_0, window_bounds = array<i64: 8, 6>}, {transform_indices = @transform_1, window_bounds = array<i64: 8, 6>}]} {
    %c0 = arith.constant 0 : index
    %c0_0 = arith.constant 0 : index
    %0 = vector.load %arg1[%c0, %c0_0] : memref<8x6xf32, #tpu.memory_space<vmem>>, vector<8x6xf32>
    %cst = arith.constant dense<0xFF800000> : vector<8xf32>
    %1 = vector.multi_reduction <maximumf>, %0, %cst [1] : vector<8x6xf32> to vector<8xf32>
    %2 = vector.shape_cast %1 : vector<8xf32> to vector<8x1xf32>
    %3 = vector.broadcast %2 : vector<8x1xf32> to vector<8x6xf32>
    %4 = arith.subf %0, %3 : vector<8x6xf32>
    %5 = math.exp %4 : vector<8x6xf32>
    %cst_1 = arith.constant dense<0.000000e+00> : vector<8xf32>
    %6 = vector.multi_reduction <add>, %5, %cst_1 [1] : vector<8x6xf32> to vector<8xf32>
    %7 = vector.shape_cast %6 : vector<8xf32> to vector<8x1xf32>
    %8 = vector.broadcast %7 : vector<8x1xf32> to vector<8x6xf32>
    %9 = arith.divf %5, %8 : vector<8x6xf32>
    %c0_2 = arith.constant 0 : index
    %c0_3 = arith.constant 0 : index
    %10 = vector.load %arg2[%c0_2, %c0_3] : memref<8x6xf32, #tpu.memory_space<vmem>>, vector<8x6xf32>
    tpu.vector_store %arg2[%c0_2, %c0_3], %9 {strides = array<i32>} : memref<8x6xf32, #tpu.memory_space<vmem>>, vector<8x6xf32>,
    return
  }
  func.func @transform_0(%arg0: i32) -> (i32, i32) {
    %c0_i32 = arith.constant 0 : i32
    %c0_i32_0 = arith.constant 0 : i32
    return %arg0, %c0_i32 : i32, i32
  }
  func.func @transform_1(%arg0: i32) -> (i32, i32) {
    %c0_i32 = arith.constant 0 : i32
    %c0_i32_0 = arith.constant 0 : i32
    return %arg0, %c0_i32 : i32, i32
  }
}

</mosaic_0001>

<llo_original>
// kernel: tpu_custom_call.1
$region0: #{tpu_custom_call.1}
  #allocation0 [shape = 'u32[]', space=smem, size = 0x4, offset = 0x4, fixed_abs, tag = 'smem constant byte address 0x4 - core index']
  #allocation1 [shape = 'u32[144,128]{1,0:T(1,128)}', space=vmem, size = 0x12000, scoped, tag = 'internal scratch']
  %s0 = inlined_call_operand.vmem [shape: f32[16,6], index: 0, kind: input, shape index: {}]
  %s1 = inlined_call_operand.vmem [shape: f32[16,6], index: 1, kind: output, shape index: {}]
  %s2 = sld [smem:[#allocation0]]
  $region37: #{tpu_custom_call.1} parent=0
    _
  %s4 = ssub.s32 1, %s2
  %s5 = scalar_select 0, %s4, %s2
  loop: start=0, step=1, limit=4
  $region2: #{tpu_custom_call.1} parent=0 // loop_pre_header
    _
  $region3: #{tpu_custom_call.1} parent=0 // loop_header
    %s7 = sphi 0, %s11
    %p8 = scmp.ge.s32.totalorder %s7, 4
    %s17 = sphi 0, %s19
    %s20 = sphi 0, %s17
    %s21 = sphi 0, %s20
    %s37 = sphi 0, %s21
    %s43 = sphi 0, %s45
    %s46 = sphi 0, %s43
    %s47 = sphi 0, %s46
    %s63 = sphi 0, %s47
  $region4: #{tpu_custom_call.1} parent=0 // loop_header_branch
    %10 = sbr.rel (%p8) target = $region8
  $region5: #{tpu_custom_call.1} parent=0 // loop_body
    %s12 = ssub.s32 %s7, 1
    %s13 = ssub.s32 %s7, 2
    %s14 = sadd.s32 %s7, 1
    %s15 = ssub.s32 %s7, %s14
    %p16 = scmp.eq.s32.totalorder %s15, 0
    %s18 = sadd.s32 %s17, 1
    %s19 = scalar_select %p16, %s17, %s18
    %p22 = pneg %p16
    %p23 = scmp.eq.s32.totalorder %s7, 1
    %p24 = por %p22, %p23
    %p25 = scmp.ne.s32.totalorder %s17, %s20
    %p26 = scmp.eq.s32.totalorder %s7, 0
    %p27 = por %p25, %p26
    %p28 = scmp.ne.s32.totalorder %s17, %s20
    %p29 = scmp.eq.s32.totalorder %s12, 1
    %p30 = por %p28, %p29
    %p31 = scmp.ne.s32.totalorder %s20, %s21
    %p32 = scmp.eq.s32.totalorder %s12, 0
    %p33 = por %p31, %p32
    %p34 = scmp.ne.s32.totalorder %s20, %s21
    %p35 = scmp.eq.s32.totalorder %s13, 1
    %p36 = por %p34, %p35
    %p38 = scmp.ne.s32.totalorder %s21, %s37
    %p39 = scmp.eq.s32.totalorder %s13, 0
    %p40 = por %p38, %p39
    %s41 = ssub.s32 %s7, %s14
    %p42 = scmp.eq.s32.totalorder %s41, 0
    %s44 = sadd.s32 %s43, 1
    %s45 = scalar_select %p42, %s43, %s44
    %p48 = pneg %p42
    %p49 = scmp.eq.s32.totalorder %s7, 1
    %p50 = por %p48, %p49
    %p51 = scmp.ne.s32.totalorder %s43, %s46
    %p52 = scmp.eq.s32.totalorder %s7, 0
    %p53 = por %p51, %p52
    %p54 = scmp.ne.s32.totalorder %s43, %s46
    %p55 = scmp.eq.s32.totalorder %s12, 1
    %p56 = por %p54, %p55
    %p57 = scmp.ne.s32.totalorder %s46, %s47
    %p58 = scmp.eq.s32.totalorder %s12, 0
    %p59 = por %p57, %p58
    %p60 = scmp.ne.s32.totalorder %s46, %s47
    %p61 = scmp.eq.s32.totalorder %s13, 1
    %p62 = por %p60, %p61
    %p64 = scmp.ne.s32.totalorder %s47, %s63
    %p65 = scmp.eq.s32.totalorder %s13, 0
    %p66 = por %p64, %p65
    %p67 = scmp.le.s32.totalorder 1, %s7
    %p68 = scmp.lt.s32.totalorder %s7, 3
    %p69 = pnand %p67, %p68
    %p70 = pneg %p69
    // Predicated region
    $region9: #{tpu_custom_call.1} parent=5 // pred_check
      _
    $region10: #{tpu_custom_call.1} parent=5 // pred_check_branch
      %72 = sbr.rel (%p69) target = $region12
    $region11: #{tpu_custom_call.1} parent=5 // pred_region
      %s73 = ssub.s32 %s7, 1
    $region12: #{tpu_custom_call.1} parent=5 // pred_fallthru
      _
    %p74 = scmp.lt.s32.totalorder %s7, 2
    // Predicated region
    $region13: #{tpu_custom_call.1} parent=5 // pred_check
      %p75 = pneg %p74
    $region14: #{tpu_custom_call.1} parent=5 // pred_check_branch
      %77 = sbr.rel (%p75) target = $region16
    $region15: #{tpu_custom_call.1} parent=5 // pred_region
      // Predicated region
      $region17: #{tpu_custom_call.1} parent=15 // pred_check
        %p78 = pneg %p27
      $region18: #{tpu_custom_call.1} parent=15 // pred_check_branch
        %80 = sbr.rel (%p78) target = $region20
      $region19: #{tpu_custom_call.1} parent=15 // pred_region
        %p81 = scmp.lt.s32.totalorder %s7, 1
        %s82 = scalar_select %p81, %s7, 1
        %s83 = smul.addr %s82, 8
        %s84 = scalar_lea.vmem %s0, %s83
      $region20: #{tpu_custom_call.1} parent=15 // pred_fallthru
        _
    $region16: #{tpu_custom_call.1} parent=5 // pred_fallthru
      _
    %p85 = scmp.le.s32.totalorder 1, %s7
    %p86 = scmp.lt.s32.totalorder %s7, 3
    %p87 = pnand %p85, %p86
    %p88 = pneg %p87
    // Predicated region
    $region21: #{tpu_custom_call.1} parent=5 // pred_check
      _
    $region22: #{tpu_custom_call.1} parent=5 // pred_check_branch
      %90 = sbr.rel (%p87) target = $region24
    $region23: #{tpu_custom_call.1} parent=5 // pred_region
      %s91 = ssub.s32 %s7, 1
      %p92 = scmp.lt.s32.totalorder %s12, 1
      %s93 = scalar_select %p92, %s12, 1
      %s94 = smul.addr %s93, 8
      %s95 = scalar_lea.vmem %s0, %s94
      %p96 = pneg %p33
      %p97 = pneg %p30
      %p98 = pneg %p59
      %p99 = pneg %p56
      %p100 = scmp.lt.s32.totalorder %s12, 1
      %s101 = scalar_select %p100, %s12, 1
      %s102 = smul.addr %s101, 8
      %s103 = scalar_lea.vmem %s1, %s102
      %p104 = scmp.lt.s32.totalorder %s12, 1
      %s105 = scalar_select %p104, %s12, 1
      %s106 = smul.addr %s105, 8
      %s107 = scalar_lea.vmem %s0, %s106
      %p108 = scmp.lt.s32.totalorder %s12, 1
      %s109 = scalar_select %p108, %s12, 1
      %s110 = smul.addr %s109, 8
      %s111 = scalar_lea.vmem %s1, %s110
      %v112 = vld [vmem:[%s107] sm:$0xff]
      %vm113 = vcmask 48128
      %v114 = vsel %vm113, %v112, -inf
      %115 = vmax.xlane.f32.xlu0 %v114
      %v116 = vpop.xlane.xlu0 %115
      %v117 = vsub.f32 %v112, %v116
      %v118 = vmul.f32 %v117, 1.442695
      %v119 = vpow.pop %v118
      %v120 = vsel %vm113, %v119, 0.0
      %121 = vadd.xlane.f32.xlu0 %v120
      %v122 = vpop.xlane.xlu0 %121
      %v123 = vrcp.pop %v122
      %v124 = vmul.f32 %v119, %v123
      %125 = vst.msk [vmem:[%s111] sm:$0xff] %vm113, %v124
      %p126 = scmp.lt.s32.totalorder %s12, 1
      %s127 = scalar_select %p126, %s12, 1
      %s128 = smul.addr %s127, 8
      %s129 = scalar_lea.vmem %s1, %s128
      // Predicated region
      $region25: #{tpu_custom_call.1} parent=23 // pred_check
        %p130 = pneg %p56
      $region26: #{tpu_custom_call.1} parent=23 // pred_check_branch
        %132 = sbr.rel (%p130) target = $region28
      $region27: #{tpu_custom_call.1} parent=23 // pred_region
        _
      $region28: #{tpu_custom_call.1} parent=23 // pred_fallthru
        _
    $region24: #{tpu_custom_call.1} parent=5 // pred_fallthru
      _
    %p133 = scmp.le.s32.totalorder 2, %s7
    // Predicated region
    $region29: #{tpu_custom_call.1} parent=5 // pred_check
      %p134 = pneg %p133
    $region30: #{tpu_custom_call.1} parent=5 // pred_check_branch
      %136 = sbr.rel (%p134) target = $region32
    $region31: #{tpu_custom_call.1} parent=5 // pred_region
      %s137 = ssub.s32 %s7, 2
      // Predicated region
      $region33: #{tpu_custom_call.1} parent=31 // pred_check
        %p138 = pneg %p62
      $region34: #{tpu_custom_call.1} parent=31 // pred_check_branch
        %140 = sbr.rel (%p138) target = $region36
      $region35: #{tpu_custom_call.1} parent=31 // pred_region
        %p141 = scmp.lt.s32.totalorder %s13, 1
        %s142 = scalar_select %p141, %s13, 1
        %s143 = smul.addr %s142, 8
        %s144 = scalar_lea.vmem %s1, %s143
      $region36: #{tpu_custom_call.1} parent=31 // pred_fallthru
        _
    $region32: #{tpu_custom_call.1} parent=5 // pred_fallthru
      _
  $region6: #{tpu_custom_call.1} parent=0 // loop_footer
    %s11 = sadd.s32 1, %s7
  $region7: #{tpu_custom_call.1} parent=0 // loop_footer_branch
    %6 = sbr.rel target = $region3
  $region8: #{tpu_custom_call.1} parent=0 // loop_exit
    _

</llo_original>
